<compile_context>
chip_gen: v6e
topology: v6e:2x2x1
jax: 0.10.0
libtpu: 0.0.40
codegen_flags: <defaults>
</compile_context>

<pallas_src>
import jax
import jax.numpy as jnp
from jax.experimental import pallas as pl
from jax.experimental.pallas import tpu as pltpu

LANE = 128                 # lane-dense feature / output width
MAX_GRAPHS_PER_STEP = 8    # graphs fused into one grid step


def classifier_kernel(adj_ref, w1_ref, b1_ref, w2_ref, b2_ref, wc_ref, bc_ref,
                      out_ref):
    G, N, _ = adj_ref.shape
    Hp = w1_ref.shape[1]

    adj = adj_ref[...]                                       # (G, N, N) bf16 0/1
    # Fused preprocessing: in-degrees (== initial feature h0) and 1/deg.
    # Degree sum accumulates in f32 so integer degrees stay exact for any N.
    deg = jnp.sum(adj.astype(jnp.float32), axis=2, keepdims=True)   # (G, N, 1)
    inv_deg = pl.reciprocal(jnp.maximum(deg, 1.0), approx=True)     # EUP slot
    has_in = deg > 0.0                                       # nodes with in-edges

    # ---- GCN layer 1: h <- ReLU(W1 * mean_in_neighbors(h0) + b1), h0 = deg ----
    # in_dim == 1, so W1 is folded into the matmul operand -> lane-dense output.
    h0w1 = deg * w1_ref[...]                                 # (G, N, Hp) == h0 @ W1^T
    agg0 = jnp.einsum('gvu,guh->gvh', adj, h0w1.astype(jnp.bfloat16),
                      preferred_element_type=jnp.float32) * inv_deg
    agg0 = jnp.where(has_in, agg0, h0w1)                     # isolated nodes keep h
    h1 = jnp.maximum(agg0 + b1_ref[...], 0.0)                # (G, N, Hp) f32

    # ---- GCN layer 2: aggregate in bf16 (adj exact), accumulate in f32 ----
    agg1 = jnp.einsum('gvu,guh->gvh', adj, h1.astype(jnp.bfloat16),
                      preferred_element_type=jnp.float32) * inv_deg
    agg1 = jnp.where(has_in, agg1, h1)                       # (G, N, Hp)

    # Shared-weight transform fused across all G graphs: one (G*N, Hp)@(Hp, Hp).
    h2 = jnp.maximum(
        jnp.dot(agg1.reshape(G * N, Hp), w2_ref[...],
                preferred_element_type=jnp.float32) + b2_ref[...], 0.0)

    # ---- readout: dgl.mean_nodes + sigmoid(Linear(H, 1)) ----
    hg = jnp.mean(h2.reshape(G, N, Hp), axis=1)              # (G, Hp)
    logit = jnp.sum(hg * wc_ref[...], axis=-1, keepdims=True) + bc_ref[0]  # (G, 1)
    # Broadcast each graph's probability across the 128 lanes of its output row
    # so the store is lane-dense (unmasked vst); the wrapper reads lane 0.
    out_ref[...] = jnp.broadcast_to(jax.nn.sigmoid(logit), out_ref.shape)


def pad_params(w1, b1, w2, b2, wc, bc):
    """Zero-pad the hidden axis to a lane-dense width ONCE (hoisted out of the
    forward hot path).  Padding is numerically exact: padded hidden units stay
    identically 0 through ReLU and are ignored by the zero-padded weights."""
    H = w2.shape[0]
    Hp = ((H + LANE - 1) // LANE) * LANE
    w1p = jnp.zeros((1, Hp), jnp.float32).at[:, :H].set(w1.reshape(1, H))
    b1p = jnp.zeros((1, Hp), jnp.float32).at[:, :H].set(b1.reshape(1, H))
    w2p = jnp.zeros((Hp, Hp), jnp.float32).at[:H, :H].set(w2)
    b2p = jnp.zeros((1, Hp), jnp.float32).at[:, :H].set(b2.reshape(1, H))
    wcp = jnp.zeros((1, Hp), jnp.float32).at[:, :H].set(wc.reshape(1, H))
    bcp = bc.astype(jnp.float32).reshape(1)                  # SMEM scalar
    return w1p, b1p, w2p, b2p, wcp, bcp


@jax.jit
def classifier_forward(adj, w1p, b1p, w2p, b2p, wcp, bcp):
    """adj: (B, N, N), adj[b, v, u] = 1 iff edge u -> v in graph b (any float
    dtype; 0/1 values are exact in bf16).  Padded params from `pad_params`.
    Returns (B, 1) sigmoid probabilities, one per graph."""
    B, N, _ = adj.shape
    Hp = w2p.shape[0]

    # Batch G graphs per grid step: amortizes per-step pipeline overhead and
    # fills the MXU with a single (G*N, Hp) matmul for the W2 transform.
    G = min(B, MAX_GRAPHS_PER_STEP)
    num_steps = pl.cdiv(B, G)
    Bp = num_steps * G

    adj = adj.astype(jnp.bfloat16)                           # halve N^2 HBM traffic
    if Bp > B:                                               # pad with empty graphs
        adj = jnp.pad(adj, ((0, Bp - B), (0, 0), (0, 0)))

    def shared(shape):
        return pl.BlockSpec(shape, lambda s: (0,) * len(shape))

    # TODO(synk): for large N, keep adj in HBM (memory_space=pl.ANY), stream
    # (rows, tk) adjacency tiles with pltpu.emit_pipeline in two passes (build
    # h1 fully, then re-stream for layer 2), and raise vmem_limit_bytes per
    # generation (v7x has only 64 MiB VMEM; use fp8/bf16 there, int8 on v5e/v6e).
    out = pl.pallas_call(
        classifier_kernel,
        out_shape=jax.ShapeDtypeStruct((num_steps, G, LANE), jnp.float32),
        grid=(num_steps,),
        in_specs=[
            pl.BlockSpec((G, N, N), lambda s: (s, 0, 0)),    # G graphs per step
            shared((1, Hp)),       # W1^T (padded)
            shared((1, Hp)),       # b1
            shared((Hp, Hp)),      # W2^T (padded)
            shared((1, Hp)),       # b2
            shared((1, Hp)),       # classify weight row
            pl.BlockSpec(memory_space=pltpu.MemorySpace.SMEM),   # classify bias
        ],
        out_specs=pl.BlockSpec((None, G, LANE), lambda s: (s, 0, 0)),
        compiler_params=pltpu.CompilerParams(
            dimension_semantics=("parallel",)),               # megacore on v7x
    )(adj, w1p, b1p, w2p, b2p, wcp, bcp)

    return out[:, :, 0].reshape(Bp)[:B].reshape(B, 1)


if __name__ == "__main__":
    key = jax.random.PRNGKey(0)
    B, N, in_dim, H = 4, 8, 1, 32
    k_adj, k1, k2, k3, k4, k5, k6 = jax.random.split(key, 7)

    # Deterministic batch of random directed graphs: adj[b, v, u] = 1 iff u -> v.
    adj = (jax.random.uniform(k_adj, (B, N, N)) < 0.4).astype(jnp.float32)

    # nn.Linear-style init (uniform +-1/sqrt(fan_in)); weights stored transposed.
    def linear_init(kw, kb, in_f, out_f):
        bound = 1.0 / (in_f ** 0.5)
        w = jax.random.uniform(kw, (in_f, out_f), minval=-bound, maxval=bound,
                               dtype=jnp.float32)
        b = jax.random.uniform(kb, (1, out_f), minval=-bound, maxval=bound,
                               dtype=jnp.float32)
        return w, b

    w1, b1 = linear_init(k1, k2, in_dim, H)      # GCN layer 1 (1 -> H)
    w2, b2 = linear_init(k3, k4, H, H)           # GCN layer 2 (H -> H)
    wc_t, bc = linear_init(k5, k6, H, 1)         # classify (H -> 1)
    wc = wc_t.T                                  # (1, H)

    # Pad weights once (outside the hot path) and pre-cast adj to bf16.
    params = pad_params(w1, b1, w2, b2, wc, bc)
    adj_bf16 = adj.astype(jnp.bfloat16)

    out = jax.block_until_ready(classifier_forward(adj_bf16, *params))

    # Pure-JAX f32 reference.  The kernel uses bf16 neighbor matmuls and the
    # EUP approximate reciprocal, hence the loosened tolerance.
    def ref_one(a):
        deg = jnp.sum(a, axis=1, keepdims=True)
        inv = 1.0 / jnp.maximum(deg, 1.0)
        h = deg
        h = jnp.maximum(jnp.where(deg > 0, (a @ h) * inv, h) @ w1 + b1, 0.0)
        h = jnp.maximum(jnp.where(deg > 0, (a @ h) * inv, h) @ w2 + b2, 0.0)
        hg = jnp.mean(h, axis=0, keepdims=True)
        return jax.nn.sigmoid(hg @ wc.T + bc)

    ref = jax.vmap(ref_one)(adj).reshape(B, 1)
    assert out.shape == (B, 1)
    assert jnp.allclose(out, ref, atol=2e-2, rtol=2e-2), (out, ref)

    print("KERNEL_OK")
</pallas_src>

<mosaic_0001>
module attributes {stable_mosaic.version = 11 : i64} {
  func.func @classifier_kernel(%arg0: i32, %arg1: memref<4x8x8xbf16, #tpu.memory_space<vmem>>, %arg2: memref<1x128xf32, #tpu.memory_space<vmem>>, %arg3: memref<1x128xf32, #tpu.memory_space<vmem>>, %arg4: memref<128x128xf32, #tpu.memory_space<vmem>>, %arg5: memref<1x128xf32, #tpu.memory_space<vmem>>, %arg6: memref<1x128xf32, #tpu.memory_space<vmem>>, %arg7: memref<1xf32, #tpu.memory_space<smem>>, %arg8: memref<1x4x128xf32, #tpu.memory_space<vmem>>) attributes {dimension_semantics = [#tpu.dimension_semantics<parallel>], iteration_bounds = array<i64: 1>, scalar_prefetch = 0 : i64, scratch_operands = 0 : i64, tpu.core_type = #tpu.core_type<tc>, window_params = [{transform_indices = @transform_0, window_bounds = array<i64: 4, 8, 8>}, {pipeline_mode = #tpu.pipeline_mode<synchronous>, transform_indices = @transform_1, window_bounds = array<i64: 1, 128>}, {pipeline_mode = #tpu.pipeline_mode<synchronous>, transform_indices = @transform_2, window_bounds = array<i64: 1, 128>}, {pipeline_mode = #tpu.pipeline_mode<synchronous>, transform_indices = @transform_3, window_bounds = array<i64: 128, 128>}, {pipeline_mode = #tpu.pipeline_mode<synchronous>, transform_indices = @transform_4, window_bounds = array<i64: 1, 128>}, {pipeline_mode = #tpu.pipeline_mode<synchronous>, transform_indices = @transform_5, window_bounds = array<i64: 1, 128>}, {transform_indices = @transform_6, window_bounds = array<i64: 1>}, {transform_indices = @transform_7, window_bounds = array<i64: 1, 4, 128>}]} {
    %c0 = arith.constant 0 : index
    %c0_0 = arith.constant 0 : index
    %c0_1 = arith.constant 0 : index
    %0 = vector.load %arg1[%c0, %c0_0, %c0_1] : memref<4x8x8xbf16, #tpu.memory_space<vmem>>, vector<4x8x8xbf16>
    %1 = arith.extf %0 : vector<4x8x8xbf16> to vector<4x8x8xf32>
    %cst = arith.constant dense<0.000000e+00> : vector<4x8xf32>
    %2 = vector.multi_reduction <add>, %1, %cst [2] : vector<4x8x8xf32> to vector<4x8xf32>
    %3 = vector.shape_cast %2 : vector<4x8xf32> to vector<4x8x1xf32>
    %cst_2 = arith.constant 1.000000e+00 : f32
    %4 = vector.broadcast %cst_2 : f32 to vector<4x8x1xf32>
    %5 = arith.maximumf %3, %4 : vector<4x8x1xf32>
    %6 = tpu.reciprocal %5 {approx = true} : vector<4x8x1xf32> -> vector<4x8x1xf32>
    %cst_3 = arith.constant 0.000000e+00 : f32
    %7 = vector.broadcast %cst_3 : f32 to vector<4x8x1xf32>
    %8 = arith.cmpf ogt, %3, %7 : vector<4x8x1xf32>
    %c0_4 = arith.constant 0 : index
    %c0_5 = arith.constant 0 : index
    %9 = vector.load %arg2[%c0_4, %c0_5] : memref<1x128xf32, #tpu.memory_space<vmem>>, vector<1x128xf32>
    %10 = vector.shape_cast %9 : vector<1x128xf32> to vector<1x1x128xf32>
    %11 = vector.broadcast %3 : vector<4x8x1xf32> to vector<4x8x128xf32>
    %12 = vector.broadcast %10 : vector<1x1x128xf32> to vector<4x8x128xf32>
    %13 = arith.mulf %11, %12 : vector<4x8x128xf32>
    %14 = arith.truncf %13 : vector<4x8x128xf32> to vector<4x8x128xbf16>
    "tpu.trace_start"() <{level = 10 : i32, message = "gvu,guh->gvh"}> : () -> ()
    %cst_6 = arith.constant dense<0.000000e+00> : vector<4x8x128xf32>
    %15 = tpu.matmul %0, %14, %cst_6 {dimension_numbers = #tpu.dot_dimension_numbers<[2], [1], [1], [2], [0, 0, 0, 1, 1, 2], [0], [0]>} : vector<4x8x8xbf16>, vector<4x8x128xbf16>, vector<4x8x128xf32> -> vector<4x8x128xf32>
    "tpu.trace_stop"() : () -> ()
    %16 = vector.broadcast %6 : vector<4x8x1xf32> to vector<4x8x128xf32>
    %17 = arith.mulf %15, %16 : vector<4x8x128xf32>
    %18 = vector.shape_cast %8 : vector<4x8x1xi1> to vector<4x8x1xi1>
    %19 = vector.broadcast %18 : vector<4x8x1xi1> to vector<4x8x128xi1>
    %20 = arith.select %19, %17, %13 : vector<4x8x128xi1>, vector<4x8x128xf32>
    %c0_7 = arith.constant 0 : index
    %c0_8 = arith.constant 0 : index
    %21 = vector.load %arg3[%c0_7, %c0_8] : memref<1x128xf32, #tpu.memory_space<vmem>>, vector<1x128xf32>
    %22 = vector.shape_cast %21 : vector<1x128xf32> to vector<1x1x128xf32>
    %23 = vector.broadcast %22 : vector<1x1x128xf32> to vector<4x8x128xf32>
    %24 = arith.addf %20, %23 : vector<4x8x128xf32>
    %cst_9 = arith.constant 0.000000e+00 : f32
    %25 = vector.broadcast %cst_9 : f32 to vector<4x8x128xf32>
    %26 = arith.maximumf %24, %25 : vector<4x8x128xf32>
    %27 = arith.truncf %26 : vector<4x8x128xf32> to vector<4x8x128xbf16>
    "tpu.trace_start"() <{level = 10 : i32, message = "gvu,guh->gvh"}> : () -> ()
    %cst_10 = arith.constant dense<0.000000e+00> : vector<4x8x128xf32>
    %28 = tpu.matmul %0, %27, %cst_10 {dimension_numbers = #tpu.dot_dimension_numbers<[2], [1], [1], [2], [0, 0, 0, 1, 1, 2], [0], [0]>} : vector<4x8x8xbf16>, vector<4x8x128xbf16>, vector<4x8x128xf32> -> vector<4x8x128xf32>
    "tpu.trace_stop"() : () -> ()
    %29 = vector.broadcast %6 : vector<4x8x1xf32> to vector<4x8x128xf32>
    %30 = arith.mulf %28, %29 : vector<4x8x128xf32>
    %31 = vector.shape_cast %8 : vector<4x8x1xi1> to vector<4x8x1xi1>
    %32 = vector.broadcast %31 : vector<4x8x1xi1> to vector<4x8x128xi1>
    %33 = arith.select %32, %30, %26 : vector<4x8x128xi1>, vector<4x8x128xf32>
    %34 = vector.shape_cast %33 : vector<4x8x128xf32> to vector<32x128xf32>
    %c0_11 = arith.constant 0 : index
    %c0_12 = arith.constant 0 : index
    %35 = vector.load %arg4[%c0_11, %c0_12] : memref<128x128xf32, #tpu.memory_space<vmem>>, vector<128x128xf32>
    %cst_13 = arith.constant dense<0.000000e+00> : vector<32x128xf32>
    %36 = tpu.matmul %34, %35, %cst_13 {dimension_numbers = #tpu.dot_dimension_numbers<[1], [0], [0], [1], [0, 0, 1, 1], [], []>} : vector<32x128xf32>, vector<128x128xf32>, vector<32x128xf32> -> vector<32x128xf32>
    %c0_14 = arith.constant 0 : index
    %c0_15 = arith.constant 0 : index
    %37 = vector.load %arg5[%c0_14, %c0_15] : memref<1x128xf32, #tpu.memory_space<vmem>>, vector<1x128xf32>
    %38 = vector.broadcast %37 : vector<1x128xf32> to vector<32x128xf32>
    %39 = arith.addf %36, %38 : vector<32x128xf32>
    %cst_16 = arith.constant 0.000000e+00 : f32
    %40 = vector.broadcast %cst_16 : f32 to vector<32x128xf32>
    %41 = arith.maximumf %39, %40 : vector<32x128xf32>
    %42 = vector.shape_cast %41 : vector<32x128xf32> to vector<4x8x128xf32>
    %cst_17 = arith.constant dense<0.000000e+00> : vector<4x128xf32>
    %43 = vector.multi_reduction <add>, %42, %cst_17 [1] : vector<4x8x128xf32> to vector<4x128xf32>
    %cst_18 = arith.constant 8.000000e+00 : f32
    %44 = vector.broadcast %cst_18 : f32 to vector<4x128xf32>
    %45 = arith.divf %43, %44 : vector<4x128xf32>
    %c0_19 = arith.constant 0 : index
    %c0_20 = arith.constant 0 : index
    %46 = vector.load %arg6[%c0_19, %c0_20] : memref<1x128xf32, #tpu.memory_space<vmem>>, vector<1x128xf32>
    %47 = vector.broadcast %46 : vector<1x128xf32> to vector<4x128xf32>
    %48 = arith.mulf %45, %47 : vector<4x128xf32>
    %cst_21 = arith.constant dense<0.000000e+00> : vector<4xf32>
    %49 = vector.multi_reduction <add>, %48, %cst_21 [1] : vector<4x128xf32> to vector<4xf32>
    %50 = vector.shape_cast %49 : vector<4xf32> to vector<4x1xf32>
    %c0_22 = arith.constant 0 : index
    %51 = memref.load %arg7[%c0_22] : memref<1xf32, #tpu.memory_space<smem>>
    %52 = vector.broadcast %51 : f32 to vector<4x1xf32>
    %53 = arith.addf %50, %52 : vector<4x1xf32>
    %54 = arith.negf %53 : vector<4x1xf32>
    %55 = math.exp %54 : vector<4x1xf32>
    %cst_23 = arith.constant 1.000000e+00 : f32
    %56 = vector.broadcast %cst_23 : f32 to vector<4x1xf32>
    %57 = arith.addf %56, %55 : vector<4x1xf32>
    %58 = arith.divf %56, %57 : vector<4x1xf32>
    %59 = vector.shape_cast %58 : vector<4x1xf32> to vector<4x1xf32>
    %60 = vector.broadcast %59 : vector<4x1xf32> to vector<4x128xf32>
    %c0_24 = arith.constant 0 : index
    %c0_25 = arith.constant 0 : index
    %c0_26 = arith.constant 0 : index
    %61 = vector.load %arg8[%c0_24, %c0_25, %c0_26] : memref<1x4x128xf32, #tpu.memory_space<vmem>>, vector<1x4x128xf32>
    %62 = vector.shape_cast %61 : vector<1x4x128xf32> to vector<4x128xf32>
    %63 = vector.shape_cast %60 : vector<4x128xf32> to vector<1x4x128xf32>
    tpu.vector_store %arg8[%c0_24, %c0_25, %c0_26], %63 {strides = array<i32>} : memref<1x4x128xf32, #tpu.memory_space<vmem>>, vector<1x4x128xf32>,
    return
  }
  func.func @transform_0(%arg0: i32) -> (i32, i32, i32) {
    %c0_i32 = arith.constant 0 : i32
    %c0_i32_0 = arith.constant 0 : i32
    %c0_i32_1 = arith.constant 0 : i32
    return %arg0, %c0_i32, %c0_i32_0 : i32, i32, i32
  }
  func.func @transform_1(%arg0: i32) -> (i32, i32) {
    %c0_i32 = arith.constant 0 : i32
    %c0_i32_0 = arith.constant 0 : i32
    %c0_i32_1 = arith.constant 0 : i32
    return %c0_i32, %c0_i32_0 : i32, i32
  }
  func.func @transform_2(%arg0: i32) -> (i32, i32) {
    %c0_i32 = arith.constant 0 : i32
    %c0_i32_0 = arith.constant 0 : i32
    %c0_i32_1 = arith.constant 0 : i32
    return %c0_i32, %c0_i32_0 : i32, i32
  }
  func.func @transform_3(%arg0: i32) -> (i32, i32) {
    %c0_i32 = arith.constant 0 : i32
    %c0_i32_0 = arith.constant 0 : i32
    %c0_i32_1 = arith.constant 0 : i32
    return %c0_i32, %c0_i32_0 : i32, i32
  }
  func.func @transform_4(%arg0: i32) -> (i32, i32) {
    %c0_i32 = arith.constant 0 : i32
    %c0_i32_0 = arith.constant 0 : i32
    %c0_i32_1 = arith.constant 0 : i32
    return %c0_i32, %c0_i32_0 : i32, i32
  }
  func.func @transform_5(%arg0: i32) -> (i32, i32) {
    %c0_i32 = arith.constant 0 : i32
    %c0_i32_0 = arith.constant 0 : i32
    %c0_i32_1 = arith.constant 0 : i32
    return %c0_i32, %c0_i32_0 : i32, i32
  }
  func.func @transform_6(%arg0: i32) -> i32 {
    %c0_i32 = arith.constant 0 : i32
    %c0_i32_0 = arith.constant 0 : i32
    return %c0_i32 : i32
  }
  func.func @transform_7(%arg0: i32) -> (i32, i32, i32) {
    %c0_i32 = arith.constant 0 : i32
    %c0_i32_0 = arith.constant 0 : i32
    %c0_i32_1 = arith.constant 0 : i32
    return %arg0, %c0_i32, %c0_i32_0 : i32, i32, i32
  }
}

</mosaic_0001>

<llo_original>
// kernel: classifier_forward.1
$region0: #{classifier_forward.1}
  #allocation0 [shape = 'u32[]', space=smem, size = 0x4, offset = 0x4, fixed_abs, tag = 'smem constant byte address 0x4 - core index']
  #allocation1 [shape = 'u32[144,128]{1,0:T(1,128)}', space=vmem, size = 0x12000, scoped, tag = 'internal scratch']
  #allocation2 [shape = 'f32[1]{0:T(128)S(6)}', space=smem, size = 0x200, scoped, tag = 'scoped memory for classifier_forward.1']
  %s0 = inlined_call_operand.hbm [shape: bf16[4,8,8], index: 0, kind: input, shape index: {}]
  %s1 = inlined_call_operand.vmem [shape: f32[1,128], index: 1, kind: input, shape index: {}]
  %s2 = inlined_call_operand.vmem [shape: f32[1,128], index: 2, kind: input, shape index: {}]
  %s3 = inlined_call_operand.hbm [shape: f32[128,128], index: 3, kind: input, shape index: {}]
  %s4 = inlined_call_operand.vmem [shape: f32[1,128], index: 4, kind: input, shape index: {}]
  %s5 = inlined_call_operand.vmem [shape: f32[1,128], index: 5, kind: input, shape index: {}]
  %s6 = inlined_call_operand.<no memory space> [shape: f32[1], index: 6, kind: input, shape index: {}]
  %s7 = inlined_call_operand.vmem [shape: f32[1,4,128], index: 7, kind: output, shape index: {}]
  %s8 = sld [smem:[#allocation0]]
  $region46: #{classifier_forward.1} parent=0
    _
  %s10 = ssub.s32 1, %s8
  %s11 = scalar_select 0, %s10, %s8
  %12 = sst [smem:[#allocation2]] %s6
  $region1: #{classifier_forward.1} parent=0
    #allocation3 [shape = 'u8[8192]{0}', space=vmem, size = 0x2000, scoped, tag = 'input window, operand 0, single buffered']
    #allocation4 [shape = 's32[1]{0}', space=sflag, size = 0x4, scoped, tag = 'scoped memory for classifier_forward.1']
    #allocation5 [shape = 'u8[65536]{0}', space=vmem, size = 0x10000, scoped, tag = 'input window, operand 3, single buffered']
    #allocation6 [shape = 's32[1]{0}', space=sflag, size = 0x4, scoped, tag = 'scoped memory for classifier_forward.1']
    %13 = vsyncpa [#allocation4], 0
    %14 = vsyncpa [#allocation6], 0
    // Predicated region
    $region2: #{classifier_forward.1} parent=1 // pred_check
      _
    $region3: #{classifier_forward.1} parent=1 // pred_check_branch
      %16 = sbr.rel (0) target = $region5
    $region4: #{classifier_forward.1} parent=1 // pred_region
      %s18 = ssub.s32 256, 256
      %19 = vsyncadd [#allocation4], %s18
      %s20 = sshll.u32 [#allocation3], 4
      %s21 = int_to_ptr.vmem [resolvable:$true] %s20
      %26 = dma.hbm_to_vmem [thread:$0]  %s0, 256, %s21, [#allocation4], 64, 64, 4
    $region5: #{classifier_forward.1} parent=1 // pred_fallthru
      _
    // Predicated region
    $region6: #{classifier_forward.1} parent=1 // pred_check
      _
    $region7: #{classifier_forward.1} parent=1 // pred_check_branch
      %28 = sbr.rel (0) target = $region9
    $region8: #{classifier_forward.1} parent=1 // pred_region
      _
    $region9: #{classifier_forward.1} parent=1 // pred_fallthru
      _
    // Predicated region
    $region10: #{classifier_forward.1} parent=1 // pred_check
      _
    $region11: #{classifier_forward.1} parent=1 // pred_check_branch
      %30 = sbr.rel (0) target = $region13
    $region12: #{classifier_forward.1} parent=1 // pred_region
      _
    $region13: #{classifier_forward.1} parent=1 // pred_fallthru
      _
    // Predicated region
    $region14: #{classifier_forward.1} parent=1 // pred_check
      _
    $region15: #{classifier_forward.1} parent=1 // pred_check_branch
      %32 = sbr.rel (0) target = $region17
    $region16: #{classifier_forward.1} parent=1 // pred_region
      %s34 = ssub.s32 2048, 2048
      %35 = vsyncadd [#allocation6], %s34
      %s36 = sshll.u32 [#allocation5], 4
      %s37 = int_to_ptr.vmem [resolvable:$true] %s36
      %42 = dma.hbm_to_vmem [thread:$0]  %s3, 2048, %s37, [#allocation6], 128, 128, 8
    $region17: #{classifier_forward.1} parent=1 // pred_fallthru
      _
    // Predicated region
    $region18: #{classifier_forward.1} parent=1 // pred_check
      _
    $region19: #{classifier_forward.1} parent=1 // pred_check_branch
      %44 = sbr.rel (0) target = $region21
    $region20: #{classifier_forward.1} parent=1 // pred_region
      _
    $region21: #{classifier_forward.1} parent=1 // pred_fallthru
      _
    // Predicated region
    $region22: #{classifier_forward.1} parent=1 // pred_check
      _
    $region23: #{classifier_forward.1} parent=1 // pred_check_branch
      %46 = sbr.rel (0) target = $region25
    $region24: #{classifier_forward.1} parent=1 // pred_region
      _
    $region25: #{classifier_forward.1} parent=1 // pred_fallthru
      _
    // Predicated region
    $region26: #{classifier_forward.1} parent=1 // pred_check
      _
    $region27: #{classifier_forward.1} parent=1 // pred_check_branch
      %48 = sbr.rel (0) target = $region29
    $region28: #{classifier_forward.1} parent=1 // pred_region
      _
    $region29: #{classifier_forward.1} parent=1 // pred_fallthru
      _
    // Predicated region
    $region30: #{classifier_forward.1} parent=1 // pred_check
      _
    $region31: #{classifier_forward.1} parent=1 // pred_check_branch
      %50 = sbr.rel (0) target = $region33
    $region32: #{classifier_forward.1} parent=1 // pred_region
      %51 = dma.done [#allocation4], 256
    $region33: #{classifier_forward.1} parent=1 // pred_fallthru
      _
    // Predicated region
    $region34: #{classifier_forward.1} parent=1 // pred_check
      _
    $region35: #{classifier_forward.1} parent=1 // pred_check_branch
      %53 = sbr.rel (0) target = $region37
    $region36: #{classifier_forward.1} parent=1 // pred_region
      %54 = dma.done [#allocation6], 2048
    $region37: #{classifier_forward.1} parent=1 // pred_fallthru
      _
    %v56 = vld [vmem:[#allocation3] sm:$0xf]
    %v57 = vld [vmem:[#allocation3 + $0x4] sm:$0xf]
    %v58 = vld [vmem:[#allocation3 + $0x8] sm:$0xf]
    %v59 = vld [vmem:[#allocation3 + $0xc] sm:$0xf]
    %v60 = vunpack.c.l.bf16 %v56
    %v61 = vunpack.c.l.bf16 %v57
    %v62 = vunpack.c.l.bf16 %v58
    %v63 = vunpack.c.l.bf16 %v59
    %vm64 = vcmask 64512
    %v65 = vsel %vm64, %v60, 0.0
    %66 = vadd.xlane.f32.xlu0 %v65
    %v67 = vpop.xlane.xlu0 %66
    %v68 = vsel %vm64, %v61, 0.0
    %69 = vadd.xlane.f32.xlu0 %v68
    %v70 = vpop.xlane.xlu0 %69
    %v71 = vsel %vm64, %v62, 0.0
    %72 = vadd.xlane.f32.xlu0 %v71
    %v73 = vpop.xlane.xlu0 %72
    %v74 = vsel %vm64, %v63, 0.0
    %75 = vadd.xlane.f32.xlu0 %v74
    %v76 = vpop.xlane.xlu0 %75
    %v77 = vmax.f32 %v67, 1.0
    %v78 = vmax.f32 %v70, 1.0
    %v79 = vmax.f32 %v73, 1.0
    %v80 = vmax.f32 %v76, 1.0
    %v81 = vrcp.pop %v77
    %v82 = vrcp.pop %v78
    %v83 = vrcp.pop %v79
    %v84 = vrcp.pop %v80
    %vm85 = vcmp.gt.f32.partialorder %v67, 0.0
    %vm86 = vcmp.gt.f32.partialorder %v70, 0.0
    %vm87 = vcmp.gt.f32.partialorder %v73, 0.0
    %vm88 = vcmp.gt.f32.partialorder %v76, 0.0
    %v89 = vld [vmem:[%s1] sm:$0x1]
    %v91 = vlaneseq
    %v92 = vshrl.u32 %v91, 7
    %v93 = vsub.s32 0, %v92
    %v94 = vrot.slane %v89, %v93
    %v96 = vmul.f32 %v67, %v94
    %v97 = vmul.f32 %v70, %v94
    %v98 = vmul.f32 %v73, %v94
    %v99 = vmul.f32 %v76, %v94
    %v100 = vpack.c.bf16 %v96, %v96
    %v101 = vpack.c.bf16 %v97, %v97
    %v102 = vpack.c.bf16 %v98, %v98
    %v103 = vpack.c.bf16 %v99, %v99
    %v105 = vsel %vm64, %v56, 0
    %vm107 = vcmask 1043456
    %v109 = vsel %vm107, %v100, 0
    %111 = vmatprep.subr.bf16.mxu0 0
    %112 = vmatpush1.bf16.msra.mxu0 0
    %113 = vmatprep.subr.bf16.mxu0 0
    %114 = vmatpush1.bf16.msra.mxu0 0
    %115 = vmatprep.subr.bf16.mxu0 0
    %116 = vmatpush1.bf16.msra.mxu0 0
    %117 = vmatprep.subr.bf16.mxu0 0
    %118 = vmatpush1.bf16.msra.mxu0 0
    %119 = vmatprep.subr.bf16.mxu0 0
    %120 = vmatpush1.bf16.msra.mxu0 0
    %121 = vmatprep.subr.bf16.mxu0 0
    %122 = vmatpush1.bf16.msra.mxu0 0
    %123 = vmatprep.subr.bf16.mxu0 0
    %124 = vmatpush1.bf16.msra.mxu0 0
    %125 = vmatprep.subr.bf16.mxu0 0
    %126 = vmatpush1.bf16.msra.mxu0 %v109
    %127 = vmatprep.subr.bf16.mxu0 0
    %128 = vmatpush2.bf16.msra.mxu0 0
    %129 = vmatprep.subr.bf16.mxu0 0
    %130 = vmatpush2.bf16.msra.mxu0 0
    %131 = vmatprep.subr.bf16.mxu0 0
    %132 = vmatpush2.bf16.msra.mxu0 0
    %133 = vmatprep.subr.bf16.mxu0 0
    %134 = vmatpush2.bf16.msra.mxu0 0
    %135 = vmatprep.subr.bf16.mxu0 0
    %136 = vmatpush2.bf16.msra.mxu0 0
    %137 = vmatprep.subr.bf16.mxu0 0
    %138 = vmatpush2.bf16.msra.mxu0 0
    %139 = vmatprep.subr.bf16.mxu0 0
    %140 = vmatpush2.bf16.msra.mxu0 0
    %141 = vmatprep.subr.bf16.mxu0 0
    %142 = vmatpush2.bf16.msra.mxu0 0
    %143 = vmatprep.mubr.bf16.mxu0 0
    %144 = vmatmul.mubr.bf16.gmra.mxu0 %v105
    %v145 = vpop.f32.mrf.mxu0
    %v146 = vadd.f32 0.0, %v145
    %v147 = vpop.f32.mrf.mxu0
    %v148 = vpop.f32.mrf.mxu0
    %v149 = vpop.f32.mrf.mxu0
    %150 = vdwg.mxu0
    %v152 = vsel %vm64, %v57, 0
    %v155 = vsel %vm107, %v101, 0
    %157 = vmatprep.subr.bf16.mxu0 0
    %158 = vmatpush1.bf16.msra.mxu0 0
    %159 = vmatprep.subr.bf16.mxu0 0
    %160 = vmatpush1.bf16.msra.mxu0 0
    %161 = vmatprep.subr.bf16.mxu0 0
    %162 = vmatpush1.bf16.msra.mxu0 0
    %163 = vmatprep.subr.bf16.mxu0 0
    %164 = vmatpush1.bf16.msra.mxu0 0
    %165 = vmatprep.subr.bf16.mxu0 0
    %166 = vmatpush1.bf16.msra.mxu0 0
    %167 = vmatprep.subr.bf16.mxu0 0
    %168 = vmatpush1.bf16.msra.mxu0 0
    %169 = vmatprep.subr.bf16.mxu0 0
    %170 = vmatpush1.bf16.msra.mxu0 0
    %171 = vmatprep.subr.bf16.mxu0 0
    %172 = vmatpush1.bf16.msra.mxu0 %v155
    %173 = vmatprep.subr.bf16.mxu0 0
    %174 = vmatpush2.bf16.msra.mxu0 0
    %175 = vmatprep.subr.bf16.mxu0 0
    %176 = vmatpush2.bf16.msra.mxu0 0
    %177 = vmatprep.subr.bf16.mxu0 0
    %178 = vmatpush2.bf16.msra.mxu0 0
    %179 = vmatprep.subr.bf16.mxu0 0
    %180 = vmatpush2.bf16.msra.mxu0 0
    %181 = vmatprep.subr.bf16.mxu0 0
    %182 = vmatpush2.bf16.msra.mxu0 0
    %183 = vmatprep.subr.bf16.mxu0 0
    %184 = vmatpush2.bf16.msra.mxu0 0
    %185 = vmatprep.subr.bf16.mxu0 0
    %186 = vmatpush2.bf16.msra.mxu0 0
    %187 = vmatprep.subr.bf16.mxu0 0
    %188 = vmatpush2.bf16.msra.mxu0 0
    %189 = vmatprep.mubr.bf16.mxu0 0
    %190 = vmatmul.mubr.bf16.gmra.mxu0 %v152
    %v191 = vpop.f32.mrf.mxu0
    %v192 = vadd.f32 0.0, %v191
    %v193 = vpop.f32.mrf.mxu0
    %v194 = vpop.f32.mrf.mxu0
    %v195 = vpop.f32.mrf.mxu0
    %196 = vdwg.mxu0
    %v198 = vsel %vm64, %v58, 0
    %v201 = vsel %vm107, %v102, 0
    %203 = vmatprep.subr.bf16.mxu0 0
    %204 = vmatpush1.bf16.msra.mxu0 0
    %205 = vmatprep.subr.bf16.mxu0 0
    %206 = vmatpush1.bf16.msra.mxu0 0
    %207 = vmatprep.subr.bf16.mxu0 0
    %208 = vmatpush1.bf16.msra.mxu0 0
    %209 = vmatprep.subr.bf16.mxu0 0
    %210 = vmatpush1.bf16.msra.mxu0 0
    %211 = vmatprep.subr.bf16.mxu0 0
    %212 = vmatpush1.bf16.msra.mxu0 0
    %213 = vmatprep.subr.bf16.mxu0 0
    %214 = vmatpush1.bf16.msra.mxu0 0
    %215 = vmatprep.subr.bf16.mxu0 0
    %216 = vmatpush1.bf16.msra.mxu0 0
    %217 = vmatprep.subr.bf16.mxu0 0
    %218 = vmatpush1.bf16.msra.mxu0 %v201
    %219 = vmatprep.subr.bf16.mxu0 0
    %220 = vmatpush2.bf16.msra.mxu0 0
    %221 = vmatprep.subr.bf16.mxu0 0
    %222 = vmatpush2.bf16.msra.mxu0 0
    %223 = vmatprep.subr.bf16.mxu0 0
    %224 = vmatpush2.bf16.msra.mxu0 0
    %225 = vmatprep.subr.bf16.mxu0 0
    %226 = vmatpush2.bf16.msra.mxu0 0
    %227 = vmatprep.subr.bf16.mxu0 0
    %228 = vmatpush2.bf16.msra.mxu0 0
    %229 = vmatprep.subr.bf16.mxu0 0
    %230 = vmatpush2.bf16.msra.mxu0 0
    %231 = vmatprep.subr.bf16.mxu0 0
    %232 = vmatpush2.bf16.msra.mxu0 0
    %233 = vmatprep.subr.bf16.mxu0 0
    %234 = vmatpush2.bf16.msra.mxu0 0
    %235 = vmatprep.mubr.bf16.mxu0 0
    %236 = vmatmul.mubr.bf16.gmra.mxu0 %v198
    %v237 = vpop.f32.mrf.mxu0
    %v238 = vadd.f32 0.0, %v237
    %v239 = vpop.f32.mrf.mxu0
    %v240 = vpop.f32.mrf.mxu0
    %v241 = vpop.f32.mrf.mxu0
    %242 = vdwg.mxu0
    %v244 = vsel %vm64, %v59, 0
    %v247 = vsel %vm107, %v103, 0
    %249 = vmatprep.subr.bf16.mxu0 0
    %250 = vmatpush1.bf16.msra.mxu0 0
    %251 = vmatprep.subr.bf16.mxu0 0
    %252 = vmatpush1.bf16.msra.mxu0 0
    %253 = vmatprep.subr.bf16.mxu0 0
    %254 = vmatpush1.bf16.msra.mxu0 0
    %255 = vmatprep.subr.bf16.mxu0 0
    %256 = vmatpush1.bf16.msra.mxu0 0
    %257 = vmatprep.subr.bf16.mxu0 0
    %258 = vmatpush1.bf16.msra.mxu0 0
    %259 = vmatprep.subr.bf16.mxu0 0
    %260 = vmatpush1.bf16.msra.mxu0 0
    %261 = vmatprep.subr.bf16.mxu0 0
    %262 = vmatpush1.bf16.msra.mxu0 0
    %263 = vmatprep.subr.bf16.mxu0 0
    %264 = vmatpush1.bf16.msra.mxu0 %v247
    %265 = vmatprep.subr.bf16.mxu0 0
    %266 = vmatpush2.bf16.msra.mxu0 0
    %267 = vmatprep.subr.bf16.mxu0 0
    %268 = vmatpush2.bf16.msra.mxu0 0
    %269 = vmatprep.subr.bf16.mxu0 0
    %270 = vmatpush2.bf16.msra.mxu0 0
    %271 = vmatprep.subr.bf16.mxu0 0
    %272 = vmatpush2.bf16.msra.mxu0 0
    %273 = vmatprep.subr.bf16.mxu0 0
    %274 = vmatpush2.bf16.msra.mxu0 0
    %275 = vmatprep.subr.bf16.mxu0 0
    %276 = vmatpush2.bf16.msra.mxu0 0
    %277 = vmatprep.subr.bf16.mxu0 0
    %278 = vmatpush2.bf16.msra.mxu0 0
    %279 = vmatprep.subr.bf16.mxu0 0
    %280 = vmatpush2.bf16.msra.mxu0 0
    %281 = vmatprep.mubr.bf16.mxu0 0
    %282 = vmatmul.mubr.bf16.gmra.mxu0 %v244
    %v283 = vpop.f32.mrf.mxu0
    %v284 = vadd.f32 0.0, %v283
    %v285 = vpop.f32.mrf.mxu0
    %v286 = vpop.f32.mrf.mxu0
    %v287 = vpop.f32.mrf.mxu0
    %288 = vdwg.mxu0
    %v289 = vmul.f32 %v146, %v81
    %v290 = vmul.f32 %v192, %v82
    %v291 = vmul.f32 %v238, %v83
    %v292 = vmul.f32 %v284, %v84
    %v293 = vsel %vm85, 1, 0
    %v294 = vsel %vm86, 1, 0
    %v295 = vsel %vm87, 1, 0
    %v296 = vsel %vm88, 1, 0
    %vm297 = vcmp.eq.s32.totalorder %v293, 1
    %vm298 = vcmp.eq.s32.totalorder %v294, 1
    %vm299 = vcmp.eq.s32.totalorder %v295, 1
    %vm300 = vcmp.eq.s32.totalorder %v296, 1
    %v301 = vsel %vm297, %v289, %v96
    %v302 = vsel %vm298, %v290, %v97
    %v303 = vsel %vm299, %v291, %v98
    %v304 = vsel %vm300, %v292, %v99
    %v305 = vld [vmem:[%s2] sm:$0x1]
    %v307 = vlaneseq
    %v308 = vshrl.u32 %v307, 7
    %v309 = vsub.s32 0, %v308
    %v310 = vrot.slane %v305, %v309
    %v312 = vadd.f32 %v301, %v310
    %v313 = vadd.f32 %v302, %v310
    %v314 = vadd.f32 %v303, %v310
    %v315 = vadd.f32 %v304, %v310
    %v316 = vmax.f32 %v312, 0.0
    %v317 = vmax.f32 %v313, 0.0
    %v318 = vmax.f32 %v314, 0.0
    %v319 = vmax.f32 %v315, 0.0
    %v320 = vpack.c.bf16 %v316, %v316
    %v321 = vpack.c.bf16 %v317, %v317
    %v322 = vpack.c.bf16 %v318, %v318
    %v323 = vpack.c.bf16 %v319, %v319
    %v325 = vsel %vm107, %v320, 0
    %327 = vmatprep.subr.bf16.mxu0 0
    %328 = vmatpush1.bf16.msra.mxu0 0
    %329 = vmatprep.subr.bf16.mxu0 0
    %330 = vmatpush1.bf16.msra.mxu0 0
    %331 = vmatprep.subr.bf16.mxu0 0
    %332 = vmatpush1.bf16.msra.mxu0 0
    %333 = vmatprep.subr.bf16.mxu0 0
    %334 = vmatpush1.bf16.msra.mxu0 0
    %335 = vmatprep.subr.bf16.mxu0 0
    %336 = vmatpush1.bf16.msra.mxu0 0
    %337 = vmatprep.subr.bf16.mxu0 0
    %338 = vmatpush1.bf16.msra.mxu0 0
    %339 = vmatprep.subr.bf16.mxu0 0
    %340 = vmatpush1.bf16.msra.mxu0 0
    %341 = vmatprep.subr.bf16.mxu0 0
    %342 = vmatpush1.bf16.msra.mxu0 %v325
    %343 = vmatprep.subr.bf16.mxu0 0
    %344 = vmatpush2.bf16.msra.mxu0 0
    %345 = vmatprep.subr.bf16.mxu0 0
    %346 = vmatpush2.bf16.msra.mxu0 0
    %347 = vmatprep.subr.bf16.mxu0 0
    %348 = vmatpush2.bf16.msra.mxu0 0
    %349 = vmatprep.subr.bf16.mxu0 0
    %350 = vmatpush2.bf16.msra.mxu0 0
    %351 = vmatprep.subr.bf16.mxu0 0
    %352 = vmatpush2.bf16.msra.mxu0 0
    %353 = vmatprep.subr.bf16.mxu0 0
    %354 = vmatpush2.bf16.msra.mxu0 0
    %355 = vmatprep.subr.bf16.mxu0 0
    %356 = vmatpush2.bf16.msra.mxu0 0
    %357 = vmatprep.subr.bf16.mxu0 0
    %358 = vmatpush2.bf16.msra.mxu0 0
    %359 = vmatprep.mubr.bf16.mxu0 0
    %360 = vmatmul.mubr.bf16.gmra.mxu0 %v105
    %v361 = vpop.f32.mrf.mxu0
    %v362 = vadd.f32 0.0, %v361
    %v363 = vpop.f32.mrf.mxu0
    %v364 = vpop.f32.mrf.mxu0
    %v365 = vpop.f32.mrf.mxu0
    %366 = vdwg.mxu0
    %v368 = vsel %vm107, %v321, 0
    %370 = vmatprep.subr.bf16.mxu0 0
    %371 = vmatpush1.bf16.msra.mxu0 0
    %372 = vmatprep.subr.bf16.mxu0 0
    %373 = vmatpush1.bf16.msra.mxu0 0
    %374 = vmatprep.subr.bf16.mxu0 0
    %375 = vmatpush1.bf16.msra.mxu0 0
    %376 = vmatprep.subr.bf16.mxu0 0
    %377 = vmatpush1.bf16.msra.mxu0 0
    %378 = vmatprep.subr.bf16.mxu0 0
    %379 = vmatpush1.bf16.msra.mxu0 0
    %380 = vmatprep.subr.bf16.mxu0 0
    %381 = vmatpush1.bf16.msra.mxu0 0
    %382 = vmatprep.subr.bf16.mxu0 0
    %383 = vmatpush1.bf16.msra.mxu0 0
    %384 = vmatprep.subr.bf16.mxu0 0
    %385 = vmatpush1.bf16.msra.mxu0 %v368
    %386 = vmatprep.subr.bf16.mxu0 0
    %387 = vmatpush2.bf16.msra.mxu0 0
    %388 = vmatprep.subr.bf16.mxu0 0
    %389 = vmatpush2.bf16.msra.mxu0 0
    %390 = vmatprep.subr.bf16.mxu0 0
    %391 = vmatpush2.bf16.msra.mxu0 0
    %392 = vmatprep.subr.bf16.mxu0 0
    %393 = vmatpush2.bf16.msra.mxu0 0
    %394 = vmatprep.subr.bf16.mxu0 0
    %395 = vmatpush2.bf16.msra.mxu0 0
    %396 = vmatprep.subr.bf16.mxu0 0
    %397 = vmatpush2.bf16.msra.mxu0 0
    %398 = vmatprep.subr.bf16.mxu0 0
    %399 = vmatpush2.bf16.msra.mxu0 0
    %400 = vmatprep.subr.bf16.mxu0 0
    %401 = vmatpush2.bf16.msra.mxu0 0
    %402 = vmatprep.mubr.bf16.mxu0 0
    %403 = vmatmul.mubr.bf16.gmra.mxu0 %v152
    %v404 = vpop.f32.mrf.mxu0
    %v405 = vadd.f32 0.0, %v404
    %v406 = vpop.f32.mrf.mxu0
    %v407 = vpop.f32.mrf.mxu0
    %v408 = vpop.f32.mrf.mxu0
    %409 = vdwg.mxu0
    %v411 = vsel %vm107, %v322, 0
    %413 = vmatprep.subr.bf16.mxu0 0
    %414 = vmatpush1.bf16.msra.mxu0 0
    %415 = vmatprep.subr.bf16.mxu0 0
    %416 = vmatpush1.bf16.msra.mxu0 0
    %417 = vmatprep.subr.bf16.mxu0 0
    %418 = vmatpush1.bf16.msra.mxu0 0
    %419 = vmatprep.subr.bf16.mxu0 0
    %420 = vmatpush1.bf16.msra.mxu0 0
    %421 = vmatprep.subr.bf16.mxu0 0
    %422 = vmatpush1.bf16.msra.mxu0 0
    %423 = vmatprep.subr.bf16.mxu0 0
    %424 = vmatpush1.bf16.msra.mxu0 0
    %425 = vmatprep.subr.bf16.mxu0 0
    %426 = vmatpush1.bf16.msra.mxu0 0
    %427 = vmatprep.subr.bf16.mxu0 0
    %428 = vmatpush1.bf16.msra.mxu0 %v411
    %429 = vmatprep.subr.bf16.mxu0 0
    %430 = vmatpush2.bf16.msra.mxu0 0
    %431 = vmatprep.subr.bf16.mxu0 0
    %432 = vmatpush2.bf16.msra.mxu0 0
    %433 = vmatprep.subr.bf16.mxu0 0
    %434 = vmatpush2.bf16.msra.mxu0 0
    %435 = vmatprep.subr.bf16.mxu0 0
    %436 = vmatpush2.bf16.msra.mxu0 0
    %437 = vmatprep.subr.bf16.mxu0 0
    %438 = vmatpush2.bf16.msra.mxu0 0
    %439 = vmatprep.subr.bf16.mxu0 0
    %440 = vmatpush2.bf16.msra.mxu0 0
    %441 = vmatprep.subr.bf16.mxu0 0
    %442 = vmatpush2.bf16.msra.mxu0 0
    %443 = vmatprep.subr.bf16.mxu0 0
    %444 = vmatpush2.bf16.msra.mxu0 0
    %445 = vmatprep.mubr.bf16.mxu0 0
    %446 = vmatmul.mubr.bf16.gmra.mxu0 %v198
    %v447 = vpop.f32.mrf.mxu0
    %v448 = vadd.f32 0.0, %v447
    %v449 = vpop.f32.mrf.mxu0
    %v450 = vpop.f32.mrf.mxu0
    %v451 = vpop.f32.mrf.mxu0
    %452 = vdwg.mxu0
    %v454 = vsel %vm107, %v323, 0
    %456 = vmatprep.subr.bf16.mxu0 0
    %457 = vmatpush1.bf16.msra.mxu0 0
    %458 = vmatprep.subr.bf16.mxu0 0
    %459 = vmatpush1.bf16.msra.mxu0 0
    %460 = vmatprep.subr.bf16.mxu0 0
    %461 = vmatpush1.bf16.msra.mxu0 0
    %462 = vmatprep.subr.bf16.mxu0 0
    %463 = vmatpush1.bf16.msra.mxu0 0
    %464 = vmatprep.subr.bf16.mxu0 0
    %465 = vmatpush1.bf16.msra.mxu0 0
    %466 = vmatprep.subr.bf16.mxu0 0
    %467 = vmatpush1.bf16.msra.mxu0 0
    %468 = vmatprep.subr.bf16.mxu0 0
    %469 = vmatpush1.bf16.msra.mxu0 0
    %470 = vmatprep.subr.bf16.mxu0 0
    %471 = vmatpush1.bf16.msra.mxu0 %v454
    %472 = vmatprep.subr.bf16.mxu0 0
    %473 = vmatpush2.bf16.msra.mxu0 0
    %474 = vmatprep.subr.bf16.mxu0 0
    %475 = vmatpush2.bf16.msra.mxu0 0
    %476 = vmatprep.subr.bf16.mxu0 0
    %477 = vmatpush2.bf16.msra.mxu0 0
    %478 = vmatprep.subr.bf16.mxu0 0
    %479 = vmatpush2.bf16.msra.mxu0 0
    %480 = vmatprep.subr.bf16.mxu0 0
    %481 = vmatpush2.bf16.msra.mxu0 0
    %482 = vmatprep.subr.bf16.mxu0 0
    %483 = vmatpush2.bf16.msra.mxu0 0
    %484 = vmatprep.subr.bf16.mxu0 0
    %485 = vmatpush2.bf16.msra.mxu0 0
    %486 = vmatprep.subr.bf16.mxu0 0
    %487 = vmatpush2.bf16.msra.mxu0 0
    %488 = vmatprep.mubr.bf16.mxu0 0
    %489 = vmatmul.mubr.bf16.gmra.mxu0 %v244
    %v490 = vpop.f32.mrf.mxu0
    %v491 = vadd.f32 0.0, %v490
    %v492 = vpop.f32.mrf.mxu0
    %v493 = vpop.f32.mrf.mxu0
    %v494 = vpop.f32.mrf.mxu0
    %495 = vdwg.mxu0
    %v496 = vmul.f32 %v362, %v81
    %v497 = vmul.f32 %v405, %v82
    %v498 = vmul.f32 %v448, %v83
    %v499 = vmul.f32 %v491, %v84
    %v500 = vsel %vm297, %v496, %v316
    %v501 = vsel %vm298, %v497, %v317
    %v502 = vsel %vm299, %v498, %v318
    %v503 = vsel %vm300, %v499, %v319
    %v504 = vld [vmem:[#allocation5] sm:$0xff]
    %v505 = vld [vmem:[#allocation5 + $0x8] sm:$0xff]
    %v506 = vld [vmem:[#allocation5 + $0x10] sm:$0xff]
    %v507 = vld [vmem:[#allocation5 + $0x18] sm:$0xff]
    %v508 = vld [vmem:[#allocation5 + $0x20] sm:$0xff]
    %v509 = vld [vmem:[#allocation5 + $0x28] sm:$0xff]
    %v510 = vld [vmem:[#allocation5 + $0x30] sm:$0xff]
    %v511 = vld [vmem:[#allocation5 + $0x38] sm:$0xff]
    %v512 = vld [vmem:[#allocation5 + $0x40] sm:$0xff]
    %v513 = vld [vmem:[#allocation5 + $0x48] sm:$0xff]
    %v514 = vld [vmem:[#allocation5 + $0x50] sm:$0xff]
    %v515 = vld [vmem:[#allocation5 + $0x58] sm:$0xff]
    %v516 = vld [vmem:[#allocation5 + $0x60] sm:$0xff]
    %v517 = vld [vmem:[#allocation5 + $0x68] sm:$0xff]
    %v518 = vld [vmem:[#allocation5 + $0x70] sm:$0xff]
    %v519 = vld [vmem:[#allocation5 + $0x78] sm:$0xff]
    %v520 = vld [vmem:[%s4] sm:$0x1]
    %v522 = vlaneseq
    %v523 = vshrl.u32 %v522, 7
    %v524 = vsub.s32 0, %v523
    %v525 = vrot.slane %v520, %v524
    %527 = vmatprep.subr.mxu0 0.0
    %528 = vmatpush1.msra.mxu0 %v519
    %529 = vmatprep.subr.mxu0 0.0
    %530 = vmatpush1.msra.mxu0 %v518
    %531 = vmatprep.subr.mxu0 0.0
    %532 = vmatpush1.msra.mxu0 %v517
    %533 = vmatprep.subr.mxu0 0.0
    %534 = vmatpush1.msra.mxu0 %v516
    %535 = vmatprep.subr.mxu0 0.0
    %536 = vmatpush1.msra.mxu0 %v515
    %537 = vmatprep.subr.mxu0 0.0
    %538 = vmatpush1.msra.mxu0 %v514
    %539 = vmatprep.subr.mxu0 0.0
    %540 = vmatpush1.msra.mxu0 %v513
    %541 = vmatprep.subr.mxu0 0.0
    %542 = vmatpush1.msra.mxu0 %v512
    %543 = vmatprep.subr.mxu0 0.0
    %544 = vmatpush1.msra.mxu0 %v511
    %545 = vmatprep.subr.mxu0 0.0
    %546 = vmatpush1.msra.mxu0 %v510
    %547 = vmatprep.subr.mxu0 0.0
    %548 = vmatpush1.msra.mxu0 %v509
    %549 = vmatprep.subr.mxu0 0.0
    %550 = vmatpush1.msra.mxu0 %v508
    %551 = vmatprep.subr.mxu0 0.0
    %552 = vmatpush1.msra.mxu0 %v507
    %553 = vmatprep.subr.mxu0 0.0
    %554 = vmatpush1.msra.mxu0 %v506
    %555 = vmatprep.subr.mxu0 0.0
    %556 = vmatpush1.msra.mxu0 %v505
    %557 = vmatprep.subr.mxu0 0.0
    %558 = vmatpush1.msra.mxu0 %v504
    %559 = vmatprep.subr.mxu0 0.0
    %560 = vmatpush2.msra.mxu0 0.0
    %561 = vmatprep.subr.mxu0 0.0
    %562 = vmatpush2.msra.mxu0 0.0
    %563 = vmatprep.subr.mxu0 0.0
    %564 = vmatpush2.msra.mxu0 0.0
    %565 = vmatprep.subr.mxu0 0.0
    %566 = vmatpush2.msra.mxu0 0.0
    %567 = vmatprep.subr.mxu0 0.0
    %568 = vmatpush2.msra.mxu0 0.0
    %569 = vmatprep.subr.mxu0 0.0
    %570 = vmatpush2.msra.mxu0 0.0
    %571 = vmatprep.subr.mxu0 0.0
    %572 = vmatpush2.msra.mxu0 0.0
    %573 = vmatprep.subr.mxu0 0.0
    %574 = vmatpush2.msra.mxu0 0.0
    %575 = vmatprep.subr.mxu0 0.0
    %576 = vmatpush2.msra.mxu0 0.0
    %577 = vmatprep.subr.mxu0 0.0
    %578 = vmatpush2.msra.mxu0 0.0
    %579 = vmatprep.subr.mxu0 0.0
    %580 = vmatpush2.msra.mxu0 0.0
    %581 = vmatprep.subr.mxu0 0.0
    %582 = vmatpush2.msra.mxu0 0.0
    %583 = vmatprep.subr.mxu0 0.0
    %584 = vmatpush2.msra.mxu0 0.0
    %585 = vmatprep.subr.mxu0 0.0
    %586 = vmatpush2.msra.mxu0 0.0
    %587 = vmatprep.subr.mxu0 0.0
    %588 = vmatpush2.msra.mxu0 0.0
    %589 = vmatprep.subr.mxu0 0.0
    %590 = vmatpush2.msra.mxu0 0.0
    %591 = vmatprep.mubr.f32.mxu0 0.0
    %592 = vmatmul.mubr.f32.gmra.mxu0 %v500
    %v593 = vpop.f32.mrf.mxu0
    %v594 = vadd.f32 %v525, %v593
    %v595 = vpop.f32.mrf.mxu0
    %596 = vmatprep.mubr.f32.mxu0 0.0
    %597 = vmatmul.mubr.f32.gmra.mxu0 %v501
    %v598 = vpop.f32.mrf.mxu0
    %v599 = vadd.f32 %v525, %v598
    %v600 = vpop.f32.mrf.mxu0
    %601 = vmatprep.mubr.f32.mxu0 0.0
    %602 = vmatmul.mubr.f32.gmra.mxu0 %v502
    %v603 = vpop.f32.mrf.mxu0
    %v604 = vadd.f32 %v525, %v603
    %v605 = vpop.f32.mrf.mxu0
    %606 = vmatprep.mubr.f32.mxu0 0.0
    %607 = vmatmul.mubr.f32.gmra.mxu0 %v503
    %v608 = vpop.f32.mrf.mxu0
    %v609 = vadd.f32 %v525, %v608
    %v610 = vpop.f32.mrf.mxu0
    %611 = vdwg.mxu0
    %v612 = vmax.f32 %v594, 0.0
    %v613 = vmax.f32 %v599, 0.0
    %v614 = vmax.f32 %v604, 0.0
    %v615 = vmax.f32 %v609, 0.0
    %v616 = vrot.slane %v612, 4
    %v617 = vadd.f32 %v612, %v616
    %v618 = vrot.slane %v617, 2
    %v619 = vadd.f32 %v617, %v618
    %v620 = vrot.slane %v619, 1
    %v621 = vadd.f32 %v619, %v620
    %v622 = vrot.slane %v613, 4
    %v623 = vadd.f32 %v613, %v622
    %v624 = vrot.slane %v623, 2
    %v625 = vadd.f32 %v623, %v624
    %v626 = vrot.slane %v625, 1
    %v627 = vadd.f32 %v625, %v626
    %v628 = vrot.slane %v614, 4
    %v629 = vadd.f32 %v614, %v628
    %v630 = vrot.slane %v629, 2
    %v631 = vadd.f32 %v629, %v630
    %v632 = vrot.slane %v631, 1
    %v633 = vadd.f32 %v631, %v632
    %v634 = vrot.slane %v615, 4
    %v635 = vadd.f32 %v615, %v634
    %v636 = vrot.slane %v635, 2
    %v637 = vadd.f32 %v635, %v636
    %v638 = vrot.slane %v637, 1
    %v639 = vadd.f32 %v637, %v638
    %v640 = vrcp.pop 8.0
    %v641 = vmul.f32 %v621, %v640
    %v642 = vmul.f32 %v627, %v640
    %v643 = vmul.f32 %v633, %v640
    %v644 = vmul.f32 %v639, %v640
    %v645 = vld [vmem:[%s5] sm:$0x1]
    %v647 = vlaneseq
    %v648 = vshrl.u32 %v647, 7
    %v649 = vsub.s32 0, %v648
    %v650 = vrot.slane %v645, %v649
    %v652 = vmul.f32 %v641, %v650
    %v653 = vmul.f32 %v642, %v650
    %v654 = vmul.f32 %v643, %v650
    %v655 = vmul.f32 %v644, %v650
    %v660 = vrot.slane %v653, 7
    %vm661 = vcmask 1041409
    %v662 = vsel %vm661, %v660, %v652
    %v663 = vrot.slane %v654, 6
    %vm664 = vcmask 1042434
    %v665 = vsel %vm664, %v663, %v662
    %v666 = vrot.slane %v655, 5
    %vm667 = vcmask 1043459
    %v668 = vsel %vm667, %v666, %v665
    %v670 = vsel %vm107, %v668, 0.0
    %671 = vadd.xlane.f32.xlu0 %v670
    %v672 = vpop.xlane.xlu0 %671
    %s673 = sld [smem:[#allocation2]]
    %v674 = vstv %s673
    %v675 = vadd.f32 %v672, %v674
    %v676 = vxor.u32 %v675, 2147483648
    %v677 = vmul.f32 %v676, 1.442695
    %v678 = vpow.pop %v677
    %v679 = vadd.f32 %v678, 1.0
    %v680 = vrcp.pop %v679
    %v681 = vmul.f32 1.0, %v680
    %682 = vst [vmem:[%s7] sm:$0xf] %v681
    // Predicated region
    $region38: #{classifier_forward.1} parent=1 // pred_check
      _
    $region39: #{classifier_forward.1} parent=1 // pred_check_branch
      %684 = sbr.rel (0) target = $region41
    $region40: #{classifier_forward.1} parent=1 // pred_region
      _
    $region41: #{classifier_forward.1} parent=1 // pred_fallthru
      _
    // Predicated region
    $region42: #{classifier_forward.1} parent=1 // pred_check
      _
    $region43: #{classifier_forward.1} parent=1 // pred_check_branch
      %686 = sbr.rel (0) target = $region45
    $region44: #{classifier_forward.1} parent=1 // pred_region
      _
    $region45: #{classifier_forward.1} parent=1 // pred_fallthru
      _
    %687 = vsyncpa [#allocation4], 1
    %688 = vsyncpa [#allocation6], 1

</llo_original>
